<compile_context>
chip_gen: v7x
topology: tpu7x:2x2x1
jax: 0.10.0
libtpu: 0.0.40
codegen_flags: <defaults>
</compile_context>

<pallas_src>
import functools

import jax
import jax.numpy as jnp
from jax.experimental import pallas as pl
from jax.experimental.pallas import tpu as pltpu

LANE = 128
TARGET_BLOCK_ELEMS = 2048 * 128   # ~1 MiB of f32 per input block per step


# ---------------------------------------------------------------------------
# Kernels
# ---------------------------------------------------------------------------
def _sums_noweight_kernel(p_ref, t_ref, owl_ref, *,
                          rows, block_rows, sps, needs_mask):
    """Accumulate per-lane partial sums of |p - t| into a resident (1,1,W) block."""
    @pl.when(pl.program_id(1) == 0)
    def _():
        owl_ref[...] = jnp.zeros_like(owl_ref)

    d = jnp.abs(p_ref[...].astype(jnp.float32) - t_ref[...].astype(jnp.float32))
    if needs_mask:
        gb = pl.program_id(0) * sps + pl.program_id(1)
        valid = rows - gb * block_rows
        row = jax.lax.broadcasted_iota(jnp.int32, d.shape, 0)
        d = jnp.where(row < valid, d, 0.0)
    owl_ref[...] += jnp.sum(d, axis=0, keepdims=True)[None]


def _sums_weighted_kernel(p_ref, t_ref, w_ref, owl_ref, ow_ref, *,
                          rows, block_rows, sps, needs_mask):
    """Accumulate per-lane partial sums of |p - t| * w and of w."""
    @pl.when(pl.program_id(1) == 0)
    def _():
        owl_ref[...] = jnp.zeros_like(owl_ref)
        ow_ref[...] = jnp.zeros_like(ow_ref)

    p = p_ref[...].astype(jnp.float32)
    t = t_ref[...].astype(jnp.float32)
    w = w_ref[...].astype(jnp.float32)
    wl = jnp.abs(p - t) * w
    if needs_mask:
        gb = pl.program_id(0) * sps + pl.program_id(1)
        valid = rows - gb * block_rows
        row = jax.lax.broadcasted_iota(jnp.int32, wl.shape, 0)
        keep = row < valid
        wl = jnp.where(keep, wl, 0.0)
        w = jnp.where(keep, w, 0.0)
    owl_ref[...] += jnp.sum(wl, axis=0, keepdims=True)[None]
    ow_ref[...] += jnp.sum(w, axis=0, keepdims=True)[None]


def _elem_kernel(p_ref, t_ref, w_ref, o_ref):
    """Elementwise |p - t| * w (reduction='none' with a weight)."""
    o_ref[...] = (jnp.abs(p_ref[...].astype(jnp.float32)
                          - t_ref[...].astype(jnp.float32))
                  * w_ref[...].astype(jnp.float32)).astype(o_ref.dtype)


# ---------------------------------------------------------------------------
# Layout helpers
# ---------------------------------------------------------------------------
def _choose_width(n):
    for w in (1024, 512, 256, 128):
        if n % w == 0:
            return w
    return LANE


def _prep(x, width, rows):
    """Flatten x to 1-D and view as (rows, width); zero-pad only when needed."""
    flat = x.reshape(-1)
    pad = rows * width - flat.shape[0]
    if pad:
        flat = jnp.concatenate([flat, jnp.zeros((pad,), flat.dtype)])
    return flat.reshape(rows, width)


def _block_rows_for(rows, width):
    target = TARGET_BLOCK_ELEMS // width        # always a multiple of 8
    return rows if rows <= target else target


# ---------------------------------------------------------------------------
# pallas_call drivers
# ---------------------------------------------------------------------------
def _run_sums(p2, t2, w2=None):
    rows, width = p2.shape
    block_rows = _block_rows_for(rows, width)
    nblocks = pl.cdiv(rows, block_rows)
    nsplit = 2 if nblocks >= 2 else 1           # per-core partial sums (v7x)
    sps = pl.cdiv(nblocks, nsplit)              # steps per split
    needs_mask = (nsplit * sps * block_rows) != rows

    def in_map(c, i):
        return (jnp.minimum(c * sps + i, nblocks - 1), 0)

    def out_map(c, i):
        return (c, 0, 0)

    in_spec = pl.BlockSpec((block_rows, width), in_map)
    out_spec = pl.BlockSpec((1, 1, width), out_map)
    out_struct = jax.ShapeDtypeStruct((nsplit, 1, width), jnp.float32)
    cparams = pltpu.CompilerParams(
        dimension_semantics=("parallel", "arbitrary"))

    if w2 is None:
        kernel = functools.partial(
            _sums_noweight_kernel, rows=rows, block_rows=block_rows,
            sps=sps, needs_mask=needs_mask)
        out = pl.pallas_call(
            kernel,
            out_shape=out_struct,
            grid=(nsplit, sps),
            in_specs=[in_spec, in_spec],
            out_specs=out_spec,
            compiler_params=cparams,
        )(p2, t2)
        return jnp.sum(out), None

    kernel = functools.partial(
        _sums_weighted_kernel, rows=rows, block_rows=block_rows,
        sps=sps, needs_mask=needs_mask)
    out_wl, out_w = pl.pallas_call(
        kernel,
        out_shape=(out_struct, out_struct),
        grid=(nsplit, sps),
        in_specs=[in_spec, in_spec, in_spec],
        out_specs=(out_spec, out_spec),
        compiler_params=cparams,
    )(p2, t2, w2)
    return jnp.sum(out_wl), jnp.sum(out_w)


def _run_elementwise(p2, t2, w2, out_dtype):
    rows, width = p2.shape
    block_rows = _block_rows_for(rows, width)
    nblocks = pl.cdiv(rows, block_rows)
    spec = pl.BlockSpec((block_rows, width), lambda i: (i, 0))
    return pl.pallas_call(
        _elem_kernel,
        out_shape=jax.ShapeDtypeStruct((rows, width), out_dtype),
        grid=(nblocks,),
        in_specs=[spec, spec, spec],
        out_specs=spec,
        compiler_params=pltpu.CompilerParams(
            dimension_semantics=("parallel",)),
    )(p2, t2, w2)


# ---------------------------------------------------------------------------
# Public API
# ---------------------------------------------------------------------------
def l1_loss_pallas(pred, target, weight=None, reduction='mean'):
    """Exact reproduction of the reference `l1_loss` semantics."""
    orig_shape = pred.shape
    channels = orig_shape[1] if len(orig_shape) > 1 else 1
    n = pred.size

    width = _choose_width(n)
    rows = -(-n // width)

    p2 = _prep(pred, width, rows)
    t2 = _prep(target, width, rows)

    # Only path that returns an unreduced tensor: weight given AND reduction='none'.
    if weight is not None and reduction == 'none':
        w2 = _prep(weight, width, rows)
        out = _run_elementwise(p2, t2, w2, pred.dtype)
        out = out.reshape(-1)
        if out.shape[0] != n:
            out = out[:n]
        return out.reshape(orig_shape)

    if weight is None:
        # reference: loss = loss.mean() for any reduction when weight is None
        sum_l, _ = _run_sums(p2, t2, None)
        return sum_l / jnp.float32(n)

    w2 = _prep(weight, width, rows)
    sum_wl, sum_w = _run_sums(p2, t2, w2)
    if reduction == 'sum':
        # reference: loss = (|p-t| * w).mean()
        return sum_wl / jnp.float32(n)
    # reference 'mean' with weight: loss.sum() / (weight.sum() * loss.size(1))
    return sum_wl / (sum_w * jnp.float32(channels))


class L1loss:
    """JAX/Pallas port of the PyTorch L1loss module (forward only)."""

    def __init__(self, loss_weight=1.0, reduction='mean'):
        if reduction not in ['none', 'mean', 'sum']:
            raise ValueError
        self.loss_weight = loss_weight
        self.reduction = reduction

    def __call__(self, pred, target, weight=None, **kwargs):
        return self.loss_weight * l1_loss_pallas(
            pred, target, weight, reduction=self.reduction)


# ---------------------------------------------------------------------------
# Reference (pure jnp) for self-check
# ---------------------------------------------------------------------------
def _l1_loss_ref(pred, target, weight, reduction, loss_weight):
    loss = jnp.abs(pred - target)
    if weight is not None:
        loss = loss * weight
    if weight is None or reduction == 'sum':
        loss = loss.mean()
    elif reduction == 'mean':
        denom = weight.sum() * loss.shape[1]
        loss = loss.sum() / denom
    return loss_weight * loss


if __name__ == "__main__":
    key = jax.random.PRNGKey(0)
    k1, k2, k3 = jax.random.split(key, 3)
    shape = (2, 4, 16, 16)   # N, C, H, W
    pred = jax.random.normal(k1, shape, dtype=jnp.float32)
    target = jax.random.normal(k2, shape, dtype=jnp.float32)
    weight = jax.random.uniform(k3, shape, dtype=jnp.float32)

    # Case 1: default forward (weight=None, reduction='mean') -> plain mean
    mod_mean = L1loss(loss_weight=1.0, reduction='mean')
    out1 = jax.block_until_ready(mod_mean(pred, target))
    ref1 = _l1_loss_ref(pred, target, None, 'mean', 1.0)

    # Case 2: weighted mean
    out2 = jax.block_until_ready(mod_mean(pred, target, weight))
    ref2 = _l1_loss_ref(pred, target, weight, 'mean', 1.0)

    # Case 3: reduction='none' with weight -> elementwise tensor
    mod_none = L1loss(loss_weight=2.0, reduction='none')
    out3 = jax.block_until_ready(mod_none(pred, target, weight))
    ref3 = _l1_loss_ref(pred, target, weight, 'none', 2.0)

    # Case 4: weighted 'sum' (reference quirk: mean of the weighted loss)
    mod_sum = L1loss(loss_weight=1.0, reduction='sum')
    out4 = jax.block_until_ready(mod_sum(pred, target, weight))
    ref4 = _l1_loss_ref(pred, target, weight, 'sum', 1.0)

    assert jnp.allclose(out1, ref1, rtol=1e-5, atol=1e-5)
    assert jnp.allclose(out2, ref2, rtol=1e-5, atol=1e-5)
    assert jnp.allclose(out3, ref3, rtol=1e-5, atol=1e-5)
    assert jnp.allclose(out4, ref4, rtol=1e-5, atol=1e-5)

    print("KERNEL_OK")
</pallas_src>

<mosaic_0001>
module attributes {stable_mosaic.version = 11 : i64} {
  func.func @_sums_noweight_kernel(%arg0: i32, %arg1: i32, %arg2: memref<2x1024xf32, #tpu.memory_space<vmem>>, %arg3: memref<2x1024xf32, #tpu.memory_space<vmem>>, %arg4: memref<1x1x1024xf32, #tpu.memory_space<vmem>>) attributes {dimension_semantics = [#tpu.dimension_semantics<parallel>, #tpu.dimension_semantics<arbitrary>], iteration_bounds = array<i64: 1, 1>, scalar_prefetch = 0 : i64, scratch_operands = 0 : i64, tpu.core_type = #tpu.core_type<tc>, window_params = [{transform_indices = @transform_0, window_bounds = array<i64: 2, 1024>}, {transform_indices = @transform_1, window_bounds = array<i64: 2, 1024>}, {transform_indices = @transform_2, window_bounds = array<i64: 1, 1, 1024>}]} {
    %c0_i32 = arith.constant 0 : i32
    %0 = arith.cmpi eq, %arg1, %c0_i32 : i32
    %1 = arith.extui %0 : i1 to i32
    %c0_i32_0 = arith.constant 0 : i32
    %2 = arith.cmpi ne, %1, %c0_i32_0 : i32
    scf.if %2 {
      %cst_10 = arith.constant 0.000000e+00 : f32
      %13 = vector.broadcast %cst_10 : f32 to vector<1x1x1024xf32>
      %c0_11 = arith.constant 0 : index
      %c0_12 = arith.constant 0 : index
      %c0_13 = arith.constant 0 : index
      %14 = vector.load %arg4[%c0_11, %c0_12, %c0_13] : memref<1x1x1024xf32, #tpu.memory_space<vmem>>, vector<1x1x1024xf32>
      tpu.vector_store %arg4[%c0_11, %c0_12, %c0_13], %13 {strides = array<i32>} : memref<1x1x1024xf32, #tpu.memory_space<vmem>>, vector<1x1x1024xf32>,
    } else {
    }
    %c0 = arith.constant 0 : index
    %c0_1 = arith.constant 0 : index
    %3 = vector.load %arg2[%c0, %c0_1] : memref<2x1024xf32, #tpu.memory_space<vmem>>, vector<2x1024xf32>
    %c0_2 = arith.constant 0 : index
    %c0_3 = arith.constant 0 : index
    %4 = vector.load %arg3[%c0_2, %c0_3] : memref<2x1024xf32, #tpu.memory_space<vmem>>, vector<2x1024xf32>
    %5 = arith.subf %3, %4 : vector<2x1024xf32>
    %6 = math.absf %5 : vector<2x1024xf32>
    %c0_4 = arith.constant 0 : index
    %c0_5 = arith.constant 0 : index
    %c0_6 = arith.constant 0 : index
    %7 = vector.load %arg4[%c0_4, %c0_5, %c0_6] : memref<1x1x1024xf32, #tpu.memory_space<vmem>>, vector<1x1x1024xf32>
    %cst = arith.constant dense<0.000000e+00> : vector<1024xf32>
    %8 = vector.multi_reduction <add>, %6, %cst [0] : vector<2x1024xf32> to vector<1024xf32>
    %9 = vector.shape_cast %8 : vector<1024xf32> to vector<1x1024xf32>
    %10 = vector.shape_cast %9 : vector<1x1024xf32> to vector<1x1x1024xf32>
    %11 = arith.addf %7, %10 : vector<1x1x1024xf32>
    %c0_7 = arith.constant 0 : index
    %c0_8 = arith.constant 0 : index
    %c0_9 = arith.constant 0 : index
    %12 = vector.load %arg4[%c0_7, %c0_8, %c0_9] : memref<1x1x1024xf32, #tpu.memory_space<vmem>>, vector<1x1x1024xf32>
    tpu.vector_store %arg4[%c0_7, %c0_8, %c0_9], %11 {strides = array<i32>} : memref<1x1x1024xf32, #tpu.memory_space<vmem>>, vector<1x1x1024xf32>,
    return
  }
  func.func @transform_0(%arg0: i32, %arg1: i32) -> (i32, i32) {
    %c1_i32 = arith.constant 1 : i32
    %0 = arith.muli %arg0, %c1_i32 : i32
    %1 = arith.addi %0, %arg1 : i32
    %c0_i32 = arith.constant 0 : i32
    %2 = arith.minsi %1, %c0_i32 : i32
    %c0_i32_0 = arith.constant 0 : i32
    %c0_i32_1 = arith.constant 0 : i32
    return %2, %c0_i32_0 : i32, i32
  }
  func.func @transform_1(%arg0: i32, %arg1: i32) -> (i32, i32) {
    %c1_i32 = arith.constant 1 : i32
    %0 = arith.muli %arg0, %c1_i32 : i32
    %1 = arith.addi %0, %arg1 : i32
    %c0_i32 = arith.constant 0 : i32
    %2 = arith.minsi %1, %c0_i32 : i32
    %c0_i32_0 = arith.constant 0 : i32
    %c0_i32_1 = arith.constant 0 : i32
    return %2, %c0_i32_0 : i32, i32
  }
  func.func @transform_2(%arg0: i32, %arg1: i32) -> (i32, i32, i32) {
    %c0_i32 = arith.constant 0 : i32
    %c0_i32_0 = arith.constant 0 : i32
    %c0_i32_1 = arith.constant 0 : i32
    return %arg0, %c0_i32, %c0_i32_0 : i32, i32, i32
  }
}

</mosaic_0001>

<llo_original>
// kernel: tpu_custom_call.1
$region0: #{tpu_custom_call.1}
  #allocation0 [shape = 'u32[]', space=smem, size = 0x4, offset = 0x4, fixed_abs, tag = 'smem constant byte address 0x4 - core index']
  #allocation1 [shape = 'u32[144,128]{1,0:T(1,128)}', space=vmem, size = 0x12000, scoped, tag = 'internal scratch']
  %s0 = inlined_call_operand.hbm [shape: f32[2,1024], index: 0, kind: input, shape index: {}]
  %s1 = inlined_call_operand.hbm [shape: f32[2,1024], index: 1, kind: input, shape index: {}]
  %s2 = inlined_call_operand.hbm [shape: f32[1,1,1024], index: 2, kind: output, shape index: {}]
  %s3 = sld [smem:[#allocation0]]
  $region30: #{tpu_custom_call.1} parent=0
    _
  %s5 = ssub.s32 1, %s3
  %s6 = scalar_select 0, %s5, %s3
  $region1: #{tpu_custom_call.1} parent=0
    #allocation2 [shape = 'u8[8192]{0}', space=vmem, size = 0x2000, scoped, tag = 'input window, operand 0, single buffered']
    #allocation3 [shape = 's32[1]{0}', space=sflag, size = 0x4, scoped, tag = 'scoped memory for tpu_custom_call.1']
    #allocation4 [shape = 's32[1]{0}', space=sflag, size = 0x4, scoped, tag = 'scoped memory for tpu_custom_call.1']
    #allocation5 [shape = 'u8[8192]{0}', space=vmem, size = 0x2000, scoped, tag = 'input window, operand 1, single buffered']
    #allocation6 [shape = 's32[1]{0}', space=sflag, size = 0x4, scoped, tag = 'scoped memory for tpu_custom_call.1']
    #allocation7 [shape = 'u8[4096]{0}', space=vmem, size = 0x1000, scoped, tag = 'output window, operand 0, single buffered']
    %7 = vsyncpa [#allocation3], 0
    %8 = vsyncpa [#allocation6], 0
    %9 = vsyncpa [#allocation4], 0
    // Predicated region
    $region2: #{tpu_custom_call.1} parent=1 // pred_check
      _
    $region3: #{tpu_custom_call.1} parent=1 // pred_check_branch
      %11 = sbr.rel (0) target = $region5
    $region4: #{tpu_custom_call.1} parent=1 // pred_region
      %s12 = sadd.s32 0, 0
      %p13 = scmp.lt.s32.totalorder %s12, 0
      %s14 = scalar_select %p13, %s12, 0
      %s16 = ssub.s32 256, 256
      %17 = vsyncadd [#allocation3], %s16
      %s18 = smul.addr %s14, 8
      %s19 = smul.addr %s18, 32
      %s20 = scalar_lea.hbm %s0, %s19
      %s22 = sshll.u32 [#allocation2], 4
      %s23 = int_to_ptr.vmem [resolvable:$true] %s22
      %25 = dma.hbm_to_vmem [thread:$0]  %s20, 256, %s23, [#allocation3]
    $region5: #{tpu_custom_call.1} parent=1 // pred_fallthru
      _
    // Predicated region
    $region6: #{tpu_custom_call.1} parent=1 // pred_check
      _
    $region7: #{tpu_custom_call.1} parent=1 // pred_check_branch
      %27 = sbr.rel (0) target = $region9
    $region8: #{tpu_custom_call.1} parent=1 // pred_region
      %s28 = sadd.s32 0, 0
      %p29 = scmp.lt.s32.totalorder %s28, 0
      %s30 = scalar_select %p29, %s28, 0
      %s32 = ssub.s32 256, 256
      %33 = vsyncadd [#allocation6], %s32
      %s34 = smul.addr %s30, 8
      %s35 = smul.addr %s34, 32
      %s36 = scalar_lea.hbm %s1, %s35
      %s38 = sshll.u32 [#allocation5], 4
      %s39 = int_to_ptr.vmem [resolvable:$true] %s38
      %41 = dma.hbm_to_vmem [thread:$0]  %s36, 256, %s39, [#allocation6]
    $region9: #{tpu_custom_call.1} parent=1 // pred_fallthru
      _
    // Predicated region
    $region10: #{tpu_custom_call.1} parent=1 // pred_check
      _
    $region11: #{tpu_custom_call.1} parent=1 // pred_check_branch
      %43 = sbr.rel (0) target = $region13
    $region12: #{tpu_custom_call.1} parent=1 // pred_region
      %44 = dma.done [#allocation3], 256
    $region13: #{tpu_custom_call.1} parent=1 // pred_fallthru
      _
    // Predicated region
    $region14: #{tpu_custom_call.1} parent=1 // pred_check
      _
    $region15: #{tpu_custom_call.1} parent=1 // pred_check_branch
      %46 = sbr.rel (0) target = $region17
    $region16: #{tpu_custom_call.1} parent=1 // pred_region
      %47 = dma.done [#allocation6], 256
    $region17: #{tpu_custom_call.1} parent=1 // pred_fallthru
      _
    %s48 = sadd.s32 0, 0
    %p49 = scmp.lt.s32.totalorder %s48, 0
    %s50 = scalar_select %p49, %s48, 0
    %s51 = sadd.s32 0, 0
    %p52 = scmp.lt.s32.totalorder %s51, 0
    %s53 = scalar_select %p52, %s51, 0
    %p54 = scmp.eq.s32.totalorder 0, 0
    // Predicated region
    $region18: #{tpu_custom_call.1} parent=1 // pred_check
      %p55 = pneg %p54
    $region19: #{tpu_custom_call.1} parent=1 // pred_check_branch
      %57 = sbr.rel (%p55) target = $region21
    $region20: #{tpu_custom_call.1} parent=1 // pred_region
      %58 = vst [vmem:[#allocation7] sm:$0xff] 0.0
    $region21: #{tpu_custom_call.1} parent=1 // pred_fallthru
      _
    %v59 = vld [vmem:[#allocation2] sm:$0xff]
    %v60 = vld [vmem:[#allocation2 + $0x8] sm:$0xff]
    %v61 = vld [vmem:[#allocation5] sm:$0xff]
    %v62 = vld [vmem:[#allocation5 + $0x8] sm:$0xff]
    %v63 = vsub.f32 %v59, %v61
    %v64 = vsub.f32 %v60, %v62
    %v65 = vand.u32 2147483647, %v63
    %v66 = vand.u32 2147483647, %v64
    %v67 = vld [vmem:[#allocation7] sm:$0xff]
    %v70 = vcombine.high %v65, %v65
    %v72 = vunpack.c.l.s4 1983009808
    %v73 = vunpack.c.0.s8 %v72
    %v74 = vlaneseq
    %v75 = vshrl.u32 %v74, 7
    %v76 = vsub.s32 %v73, %v75
    %v77 = vrot.slane %v65, %v76
    %v79 = vunpack.c.l.s4 1983009808
    %v80 = vunpack.c.0.s8 %v79
    %v81 = vlaneseq
    %v82 = vshrl.u32 %v81, 7
    %v83 = vsub.s32 %v80, %v82
    %v84 = vrot.slane %v70, %v83
    %v85 = vcombine.high %v77, %v77
    %v86 = vcombine.high %v84, %v84
    %v87 = vcombine.high %v66, %v66
    %v89 = vunpack.c.l.s4 1983009808
    %v90 = vunpack.c.0.s8 %v89
    %v91 = vlaneseq
    %v92 = vshrl.u32 %v91, 7
    %v93 = vsub.s32 %v90, %v92
    %v94 = vrot.slane %v66, %v93
    %v96 = vunpack.c.l.s4 1983009808
    %v97 = vunpack.c.0.s8 %v96
    %v98 = vlaneseq
    %v99 = vshrl.u32 %v98, 7
    %v100 = vsub.s32 %v97, %v99
    %v101 = vrot.slane %v87, %v100
    %v102 = vcombine.high %v94, %v94
    %v103 = vcombine.high %v101, %v101
    %vm112 = vcmask 1041408
    %v113 = vsel %vm112, %v77, 0.0
    %v114 = vrot.slane %v113, 4
    %v115 = vadd.f32 %v113, %v114
    %v116 = vrot.slane %v115, 2
    %v117 = vadd.f32 %v115, %v116
    %v118 = vrot.slane %v117, 1
    %v119 = vadd.f32 %v117, %v118
    %v120 = vsel %vm112, %v85, 0.0
    %v121 = vrot.slane %v120, 4
    %v122 = vadd.f32 %v120, %v121
    %v123 = vrot.slane %v122, 2
    %v124 = vadd.f32 %v122, %v123
    %v125 = vrot.slane %v124, 1
    %v126 = vadd.f32 %v124, %v125
    %v127 = vsel %vm112, %v84, 0.0
    %v128 = vrot.slane %v127, 4
    %v129 = vadd.f32 %v127, %v128
    %v130 = vrot.slane %v129, 2
    %v131 = vadd.f32 %v129, %v130
    %v132 = vrot.slane %v131, 1
    %v133 = vadd.f32 %v131, %v132
    %v134 = vsel %vm112, %v86, 0.0
    %v135 = vrot.slane %v134, 4
    %v136 = vadd.f32 %v134, %v135
    %v137 = vrot.slane %v136, 2
    %v138 = vadd.f32 %v136, %v137
    %v139 = vrot.slane %v138, 1
    %v140 = vadd.f32 %v138, %v139
    %v141 = vsel %vm112, %v94, 0.0
    %v142 = vrot.slane %v141, 4
    %v143 = vadd.f32 %v141, %v142
    %v144 = vrot.slane %v143, 2
    %v145 = vadd.f32 %v143, %v144
    %v146 = vrot.slane %v145, 1
    %v147 = vadd.f32 %v145, %v146
    %v148 = vsel %vm112, %v102, 0.0
    %v149 = vrot.slane %v148, 4
    %v150 = vadd.f32 %v148, %v149
    %v151 = vrot.slane %v150, 2
    %v152 = vadd.f32 %v150, %v151
    %v153 = vrot.slane %v152, 1
    %v154 = vadd.f32 %v152, %v153
    %v155 = vsel %vm112, %v101, 0.0
    %v156 = vrot.slane %v155, 4
    %v157 = vadd.f32 %v155, %v156
    %v158 = vrot.slane %v157, 2
    %v159 = vadd.f32 %v157, %v158
    %v160 = vrot.slane %v159, 1
    %v161 = vadd.f32 %v159, %v160
    %v162 = vsel %vm112, %v103, 0.0
    %v163 = vrot.slane %v162, 4
    %v164 = vadd.f32 %v162, %v163
    %v165 = vrot.slane %v164, 2
    %v166 = vadd.f32 %v164, %v165
    %v167 = vrot.slane %v166, 1
    %v168 = vadd.f32 %v166, %v167
    %v177 = vcombine.low %v119, %v126
    %v178 = vcombine.low %v133, %v140
    %v179 = vcombine.low %v147, %v154
    %v180 = vcombine.low %v161, %v168
    %v182 = vunpack.c.l.s4 1966171168
    %v183 = vunpack.c.0.s8 %v182
    %v184 = vlaneseq
    %v185 = vshrl.u32 %v184, 7
    %v186 = vsub.s32 %v183, %v185
    %v187 = vrot.slane %v177, %v186
    %v189 = vunpack.c.l.s4 1966171168
    %v190 = vunpack.c.0.s8 %v189
    %v191 = vlaneseq
    %v192 = vshrl.u32 %v191, 7
    %v193 = vsub.s32 %v190, %v192
    %v194 = vrot.slane %v178, %v193
    %v196 = vunpack.c.l.s4 1966171168
    %v197 = vunpack.c.0.s8 %v196
    %v198 = vlaneseq
    %v199 = vshrl.u32 %v198, 7
    %v200 = vsub.s32 %v197, %v199
    %v201 = vrot.slane %v179, %v200
    %v203 = vunpack.c.l.s4 1966171168
    %v204 = vunpack.c.0.s8 %v203
    %v205 = vlaneseq
    %v206 = vshrl.u32 %v205, 7
    %v207 = vsub.s32 %v204, %v206
    %v208 = vrot.slane %v180, %v207
    %v209 = vcombine.low %v187, %v194
    %v210 = vcombine.low %v201, %v208
    %v212 = vunpack.c.l.s4 1966171168
    %v213 = vunpack.c.0.s8 %v212
    %v214 = vlaneseq
    %v215 = vshrl.u32 %v214, 7
    %v216 = vsub.s32 %v213, %v215
    %v217 = vrot.slane %v209, %v216
    %v219 = vunpack.c.l.s4 1966171168
    %v220 = vunpack.c.0.s8 %v219
    %v221 = vlaneseq
    %v222 = vshrl.u32 %v221, 7
    %v223 = vsub.s32 %v220, %v222
    %v224 = vrot.slane %v210, %v223
    %v225 = vcombine.low %v217, %v224
    %v227 = vadd.f32 %v67, %v225
    %228 = vst [vmem:[#allocation7] sm:$0xff] %v227
    // Predicated region
    $region22: #{tpu_custom_call.1} parent=1 // pred_check
      _
    $region23: #{tpu_custom_call.1} parent=1 // pred_check_branch
      %230 = sbr.rel (0) target = $region25
    $region24: #{tpu_custom_call.1} parent=1 // pred_region
      %s232 = ssub.s32 128, 128
      %233 = vsyncadd [#allocation4], %s232
      %s235 = sshll.u32 [#allocation7], 4
      %s236 = int_to_ptr.vmem [resolvable:$true] %s235
      %238 = dma.vmem_to_hbm [thread:$0]  %s236, 128, %s2, [#allocation4]
    $region25: #{tpu_custom_call.1} parent=1 // pred_fallthru
      _
    // Predicated region
    $region26: #{tpu_custom_call.1} parent=1 // pred_check
      _
    $region27: #{tpu_custom_call.1} parent=1 // pred_check_branch
      %240 = sbr.rel (0) target = $region29
    $region28: #{tpu_custom_call.1} parent=1 // pred_region
      %241 = dma.done [#allocation4], 128
    $region29: #{tpu_custom_call.1} parent=1 // pred_fallthru
      _
    %242 = vsyncpa [#allocation3], 1
    %243 = vsyncpa [#allocation6], 1
    %244 = vsyncpa [#allocation4], 1

</llo_original>
